<compile_context>
chip_gen: v7x
topology: tpu7x:2x2x1
jax: 0.10.0
libtpu: 0.0.40
codegen_flags: <defaults>
</compile_context>

<pallas_src>
import functools

import jax
import jax.numpy as jnp
from jax.experimental import pallas as pl
from jax.experimental.pallas import tpu as pltpu

LANE = 128


def _round_up(n, m):
    return ((n + m - 1) // m) * m


def _pad2d(x, rows, cols):
    return jnp.pad(x, ((0, rows - x.shape[0]), (0, cols - x.shape[1])))


def _tpu_config():
    """Returns (small_vmem, vmem_limit_bytes); conservative on unknown chips."""
    try:
        cap = int(pltpu.get_tpu_info().vmem_capacity_bytes)
    except Exception:
        return False, 32 << 20                      # unknown chip: safe everywhere
    if cap <= (64 << 20):                           # v7x-like: 64 MiB physical / TC
        return True, 32 << 20
    return False, min(96 << 20, (3 * cap) // 4)     # v5e/v6e: exploit 128 MiB VMEM


def _pick_tile_m(n_pad, small_vmem):
    """Largest row tile in {512,384,256,128} dividing n_pad (no over-padding).

    On small-VMEM chips (v7x) cap at 256 and keep >= 2 grid steps so the
    "parallel" row axis can split across the two TensorCores.
    """
    max_tile = 256 if small_vmem else 512
    if small_vmem and n_pad >= 256:
        max_tile = min(max_tile, n_pad // 2)
    for cand in (512, 384, 256, 128):
        if cand <= max_tile and n_pad % cand == 0:
            return cand
    return 128 if n_pad % 128 == 0 else n_pad


def _epilogue(z, activation, valid_cols):
    if activation == "relu":
        return jnp.maximum(z, 0.0)
    if activation == "log_softmax":
        col = jax.lax.broadcasted_iota(jnp.int32, z.shape, 1)
        z = jnp.where(col < valid_cols, z, -1e30)
        m = jnp.max(z, axis=1, keepdims=True)
        s = z - m
        # Padded lanes hold -1e30 - m, so exp() underflows to exactly 0: no
        # extra select needed inside the sum.
        lse = jnp.log(jnp.sum(jnp.exp(s), axis=1, keepdims=True))
        return s - lse
    return z


def _gcn_layer_kernel_a_xw(a_ref, xw_ref, b_ref, o_ref, *, activation, valid_cols):
    """Row tile of A_hat against the precomputed, VMEM-resident XW.

    a_ref  : (TM, N_pad)        bf16   streamed row block of normalized adjacency
    xw_ref : (N_pad, Fout_pad)  bf16   precomputed X @ W (grid-invariant)
    b_ref  : (1, Fout_pad)      f32    bias (grid-invariant)
    o_ref  : (TM, Fout_pad)            output row block
    """
    z = jnp.dot(a_ref[...], xw_ref[...], preferred_element_type=jnp.float32)
    z = z + b_ref[...]
    o_ref[...] = _epilogue(z, activation, valid_cols).astype(o_ref.dtype)


def _gcn_layer_kernel_ax_w(a_ref, x_ref, w_ref, b_ref, o_ref, *, activation, valid_cols):
    """(A_rows @ X) @ W — only used when Fout_pad > Fin_pad (rare for GCN)."""
    ax = jnp.dot(a_ref[...], x_ref[...], preferred_element_type=jnp.float32)
    z = jnp.dot(ax.astype(jnp.bfloat16), w_ref[...],
                preferred_element_type=jnp.float32)
    z = z + b_ref[...]
    o_ref[...] = _epilogue(z, activation, valid_cols).astype(o_ref.dtype)


def gcn_layer(a_p, x_p, w_p, b_p, *, tile_m, activation, valid_cols, out_dtype,
              vmem_limit):
    """One GCNConv layer (A_hat @ X @ W + b, fused activation) over row tiles."""
    n_pad = a_p.shape[0]
    fin_pad, fout_pad = w_p.shape
    assert n_pad % tile_m == 0 and tile_m % 16 == 0  # bf16 (16,128) sublane packing

    precompute_xw = fout_pad <= fin_pad  # stream A against the smaller operand
    if precompute_xw:
        # Tiny N*Fin*Fout matmul in plain XLA (f32), cast once to bf16.
        xw = jnp.dot(x_p.astype(jnp.float32), w_p.astype(jnp.float32),
                     preferred_element_type=jnp.float32).astype(jnp.bfloat16)
        kernel = functools.partial(_gcn_layer_kernel_a_xw,
                                   activation=activation, valid_cols=valid_cols)
        operands = (a_p, xw, b_p)
        resident_shapes = [(n_pad, fout_pad), (1, fout_pad)]
        flops = 2 * n_pad * n_pad * fout_pad
    else:
        kernel = functools.partial(_gcn_layer_kernel_ax_w,
                                   activation=activation, valid_cols=valid_cols)
        operands = (a_p, x_p.astype(jnp.bfloat16), w_p.astype(jnp.bfloat16), b_p)
        resident_shapes = [(n_pad, fin_pad), (fin_pad, fout_pad), (1, fout_pad)]
        flops = 2 * n_pad * n_pad * fin_pad + 2 * n_pad * fin_pad * fout_pad

    out_bytes = n_pad * fout_pad * jnp.dtype(out_dtype).itemsize
    bytes_accessed = out_bytes + sum(int(o.size) * o.dtype.itemsize for o in operands)
    transcendentals = n_pad * fout_pad if activation == "log_softmax" else 0

    def _resident_spec(shape, single_buffer):
        if single_buffer:
            # Grid-invariant block: single-buffering halves its VMEM footprint
            # without losing any pipelining (the block never changes).
            return pl.BlockSpec(shape, lambda i: (0, 0),
                                pipeline_mode=pl.Buffered(1))
        return pl.BlockSpec(shape, lambda i: (0, 0))

    def _call(single_buffer):
        in_specs = [pl.BlockSpec((tile_m, n_pad), lambda i: (i, 0))]  # streamed A
        in_specs += [_resident_spec(s, single_buffer) for s in resident_shapes]
        return pl.pallas_call(
            kernel,
            out_shape=jax.ShapeDtypeStruct((n_pad, fout_pad), out_dtype),
            grid=(n_pad // tile_m,),
            in_specs=in_specs,
            out_specs=pl.BlockSpec((tile_m, fout_pad), lambda i: (i, 0)),
            compiler_params=pltpu.CompilerParams(
                dimension_semantics=("parallel",),
                vmem_limit_bytes=vmem_limit,
            ),
            cost_estimate=pl.CostEstimate(
                flops=flops,
                transcendentals=transcendentals,
                bytes_accessed=bytes_accessed,
            ),
        )(*operands)

    try:
        return _call(True)
    except Exception:
        # Fallback if this jax build rejects pipeline_mode / Buffered(1).
        return _call(False)


def gcn_forward(a_hat, x, w1, b1, w2, b2, *, tile_m=None):
    """Fused 2-layer GCN: log_softmax(A_hat (relu(A_hat (x W1) + b1)) W2 + b2)."""
    n, f = x.shape
    h = w1.shape[1]
    c = w2.shape[1]

    small_vmem, vmem_limit = _tpu_config()

    # Pad N only to the 128-lane quantum (never up to tile_m: that would
    # quadratically inflate the dominant N^2 adjacency stream).
    n_pad = _round_up(n, LANE)
    f_pad = _round_up(f, LANE)
    h_pad = _round_up(h, LANE)
    c_pad = _round_up(c, LANE)

    if tile_m is None:
        tile_m = _pick_tile_m(n_pad, small_vmem)
    assert n_pad % tile_m == 0 and tile_m % 16 == 0

    # A_hat is the dominant HBM stream: bf16 halves its bytes (f32 accumulate).
    # TODO(synk): quantize A_hat to fp8 (e4m3) on v7x / int8-with-scale on v5e/v6e
    # to halve this stream again, and add a sparse (scalar-prefetched neighbor
    # list) path so bytes scale with E instead of N^2 for large graphs.
    a_p = _pad2d(a_hat, n_pad, n_pad).astype(jnp.bfloat16)
    x_p = _pad2d(x, n_pad, f_pad).astype(jnp.float32)
    w1_p = _pad2d(w1, f_pad, h_pad).astype(jnp.float32)
    b1_p = _pad2d(b1.reshape(1, -1), 1, h_pad).astype(jnp.float32)
    w2_p = _pad2d(w2, h_pad, c_pad).astype(jnp.float32)
    b2_p = _pad2d(b2.reshape(1, -1), 1, c_pad).astype(jnp.float32)

    # conv1 + fused ReLU (f32 activations: the h1 stream is tiny next to A).
    h1 = gcn_layer(a_p, x_p, w1_p, b1_p, tile_m=tile_m, activation="relu",
                   valid_cols=h, out_dtype=jnp.float32, vmem_limit=vmem_limit)

    # F.dropout(x, training=self.training): identity in eval mode.
    # TODO(synk): training-mode dropout via pltpu.prng_seed / prng_random_bits.

    # conv2 + fused lane-masked log_softmax over the real C classes.
    out = gcn_layer(a_p, h1, w2_p, b2_p, tile_m=tile_m, activation="log_softmax",
                    valid_cols=c, out_dtype=jnp.float32, vmem_limit=vmem_limit)

    return out[:n, :c]


def build_normalized_adjacency(edge_index, num_nodes):
    """Dense A_hat = D^-1/2 (A + I) D^-1/2, matching PyG GCNConv's gcn_norm."""
    row, col = edge_index[0], edge_index[1]
    adj = jnp.zeros((num_nodes, num_nodes), jnp.float32)
    adj = adj.at[col, row].set(1.0)        # message flows source(row) -> target(col)
    diag = jnp.arange(num_nodes)
    adj = adj.at[diag, diag].set(1.0)      # exactly one self-loop per node
    deg = jnp.sum(adj, axis=1)
    dinv = jnp.where(deg > 0, 1.0 / jnp.sqrt(deg), 0.0)
    return adj * dinv[:, None] * dinv[None, :]


def gcn_reference(a_hat, x, w1, b1, w2, b2):
    h = jnp.maximum(a_hat @ (x @ w1) + b1, 0.0)
    z = a_hat @ (h @ w2) + b2
    return jax.nn.log_softmax(z, axis=1)


def glorot(key, shape):
    fan_in, fan_out = shape
    limit = jnp.sqrt(6.0 / (fan_in + fan_out))
    return jax.random.uniform(key, shape, jnp.float32, -limit, limit)


if __name__ == "__main__":
    # Small, forward-consistent shapes:
    #   N nodes = 32, num_node_features = 8, hidden = 16, num_classes = 4
    N, F, H, C = 32, 8, 16, 4

    key = jax.random.PRNGKey(0)
    kx, ke, kw1, kw2 = jax.random.split(key, 4)

    # Node features
    x = jax.random.normal(kx, (N, F), jnp.float32)

    # Deterministic undirected graph: ring + a few chords (both directions)
    src_ring = jnp.arange(N)
    dst_ring = (src_ring + 1) % N
    rand_src = jax.random.randint(ke, (16,), 0, N)
    rand_dst = (rand_src + 5) % N
    src = jnp.concatenate([src_ring, dst_ring, rand_src, rand_dst])
    dst = jnp.concatenate([dst_ring, src_ring, rand_dst, rand_src])
    edge_index = jnp.stack([src, dst]).astype(jnp.int32)  # (2, E)

    # Parameters (deterministic glorot init, biases zero)
    w1 = glorot(kw1, (F, H))
    b1 = jnp.zeros((1, H), jnp.float32)
    w2 = glorot(kw2, (H, C))
    b2 = jnp.zeros((1, C), jnp.float32)

    a_hat = build_normalized_adjacency(edge_index, N)

    # tile_m=64 -> grid=(2,): exercises the row-tiled, "parallel" pipeline.
    out = gcn_forward(a_hat, x, w1, b1, w2, b2, tile_m=64)
    out = jax.block_until_ready(out)

    # Sanity checks: shape, log_softmax rows exp-sum to 1, close to f32 reference.
    ref = gcn_reference(a_hat, x, w1, b1, w2, b2)
    assert out.shape == (N, C)
    row_sums = jnp.exp(out).sum(axis=1)
    assert jnp.allclose(row_sums, 1.0, atol=1e-3)
    assert jnp.allclose(out, ref, atol=0.05), float(jnp.abs(out - ref).max())

    print("KERNEL_OK")
</pallas_src>

<mosaic_0001>
module attributes {stable_mosaic.version = 11 : i64} {
  func.func @_gcn_layer_kernel_a_xw(%arg0: i32, %arg1: memref<64x128xbf16, #tpu.memory_space<vmem>>, %arg2: memref<128x128xbf16, #tpu.memory_space<vmem>>, %arg3: memref<1x128xf32, #tpu.memory_space<vmem>>, %arg4: memref<64x128xf32, #tpu.memory_space<vmem>>) attributes {dimension_semantics = [#tpu.dimension_semantics<parallel>], iteration_bounds = array<i64: 2>, scalar_prefetch = 0 : i64, scratch_operands = 0 : i64, tpu.core_type = #tpu.core_type<tc>, window_params = [{transform_indices = @transform_0, window_bounds = array<i64: 64, 128>}, {pipeline_mode = #tpu.pipeline_mode<synchronous>, transform_indices = @transform_1, window_bounds = array<i64: 128, 128>}, {pipeline_mode = #tpu.pipeline_mode<synchronous>, transform_indices = @transform_2, window_bounds = array<i64: 1, 128>}, {transform_indices = @transform_3, window_bounds = array<i64: 64, 128>}]} {
    %c0 = arith.constant 0 : index
    %c0_0 = arith.constant 0 : index
    %0 = vector.load %arg1[%c0, %c0_0] : memref<64x128xbf16, #tpu.memory_space<vmem>>, vector<64x128xbf16>
    %c0_1 = arith.constant 0 : index
    %c0_2 = arith.constant 0 : index
    %1 = vector.load %arg2[%c0_1, %c0_2] : memref<128x128xbf16, #tpu.memory_space<vmem>>, vector<128x128xbf16>
    %cst = arith.constant dense<0.000000e+00> : vector<64x128xf32>
    %2 = tpu.matmul %0, %1, %cst {dimension_numbers = #tpu.dot_dimension_numbers<[1], [0], [0], [1], [0, 0, 1, 1], [], []>} : vector<64x128xbf16>, vector<128x128xbf16>, vector<64x128xf32> -> vector<64x128xf32>
    %c0_3 = arith.constant 0 : index
    %c0_4 = arith.constant 0 : index
    %3 = vector.load %arg3[%c0_3, %c0_4] : memref<1x128xf32, #tpu.memory_space<vmem>>, vector<1x128xf32>
    %4 = vector.broadcast %3 : vector<1x128xf32> to vector<64x128xf32>
    %5 = arith.addf %2, %4 : vector<64x128xf32>
    %cst_5 = arith.constant 0.000000e+00 : f32
    %6 = vector.broadcast %cst_5 : f32 to vector<64x128xf32>
    %7 = arith.maximumf %5, %6 : vector<64x128xf32>
    %c0_6 = arith.constant 0 : index
    %c0_7 = arith.constant 0 : index
    %8 = vector.load %arg4[%c0_6, %c0_7] : memref<64x128xf32, #tpu.memory_space<vmem>>, vector<64x128xf32>
    tpu.vector_store %arg4[%c0_6, %c0_7], %7 {strides = array<i32>} : memref<64x128xf32, #tpu.memory_space<vmem>>, vector<64x128xf32>,
    return
  }
  func.func @transform_0(%arg0: i32) -> (i32, i32) {
    %c0_i32 = arith.constant 0 : i32
    %c0_i32_0 = arith.constant 0 : i32
    return %arg0, %c0_i32 : i32, i32
  }
  func.func @transform_1(%arg0: i32) -> (i32, i32) {
    %c0_i32 = arith.constant 0 : i32
    %c0_i32_0 = arith.constant 0 : i32
    %c0_i32_1 = arith.constant 0 : i32
    return %c0_i32, %c0_i32_0 : i32, i32
  }
  func.func @transform_2(%arg0: i32) -> (i32, i32) {
    %c0_i32 = arith.constant 0 : i32
    %c0_i32_0 = arith.constant 0 : i32
    %c0_i32_1 = arith.constant 0 : i32
    return %c0_i32, %c0_i32_0 : i32, i32
  }
  func.func @transform_3(%arg0: i32) -> (i32, i32) {
    %c0_i32 = arith.constant 0 : i32
    %c0_i32_0 = arith.constant 0 : i32
    return %arg0, %c0_i32 : i32, i32
  }
}

module attributes {stable_mosaic.version = 11 : i64} {
  func.func @_gcn_layer_kernel_a_xw(%arg0: i32, %arg1: memref<64x128xbf16, #tpu.memory_space<vmem>>, %arg2: memref<128x128xbf16, #tpu.memory_space<vmem>>, %arg3: memref<1x128xf32, #tpu.memory_space<vmem>>, %arg4: memref<64x128xf32, #tpu.memory_space<vmem>>) attributes {dimension_semantics = [#tpu.dimension_semantics<parallel>], iteration_bounds = array<i64: 2>, scalar_prefetch = 0 : i64, scratch_operands = 0 : i64, tpu.core_type = #tpu.core_type<tc>, window_params = [{transform_indices = @transform_0, window_bounds = array<i64: 64, 128>}, {pipeline_mode = #tpu.pipeline_mode<synchronous>, transform_indices = @transform_1, window_bounds = array<i64: 128, 128>}, {pipeline_mode = #tpu.pipeline_mode<synchronous>, transform_indices = @transform_2, window_bounds = array<i64: 1, 128>}, {transform_indices = @transform_3, window_bounds = array<i64: 64, 128>}]} {
    %c0 = arith.constant 0 : index
    %c0_0 = arith.constant 0 : index
    %0 = vector.load %arg1[%c0, %c0_0] : memref<64x128xbf16, #tpu.memory_space<vmem>>, vector<64x128xbf16>
    %c0_1 = arith.constant 0 : index
    %c0_2 = arith.constant 0 : index
    %1 = vector.load %arg2[%c0_1, %c0_2] : memref<128x128xbf16, #tpu.memory_space<vmem>>, vector<128x128xbf16>
    %cst = arith.constant dense<0.000000e+00> : vector<64x128xf32>
    %2 = tpu.matmul %0, %1, %cst {dimension_numbers = #tpu.dot_dimension_numbers<[1], [0], [0], [1], [0, 0, 1, 1], [], []>} : vector<64x128xbf16>, vector<128x128xbf16>, vector<64x128xf32> -> vector<64x128xf32>
    %c0_3 = arith.constant 0 : index
    %c0_4 = arith.constant 0 : index
    %3 = vector.load %arg3[%c0_3, %c0_4] : memref<1x128xf32, #tpu.memory_space<vmem>>, vector<1x128xf32>
    %4 = vector.broadcast %3 : vector<1x128xf32> to vector<64x128xf32>
    %5 = arith.addf %2, %4 : vector<64x128xf32>
    %cst_5 = arith.constant 0.000000e+00 : f32
    %6 = vector.broadcast %cst_5 : f32 to vector<64x128xf32>
    %7 = arith.maximumf %5, %6 : vector<64x128xf32>
    %c0_6 = arith.constant 0 : index
    %c0_7 = arith.constant 0 : index
    %8 = vector.load %arg4[%c0_6, %c0_7] : memref<64x128xf32, #tpu.memory_space<vmem>>, vector<64x128xf32>
    tpu.vector_store %arg4[%c0_6, %c0_7], %7 {strides = array<i32>} : memref<64x128xf32, #tpu.memory_space<vmem>>, vector<64x128xf32>,
    return
  }
  func.func @transform_0(%arg0: i32) -> (i32, i32) {
    %c0_i32 = arith.constant 0 : i32
    %c0_i32_0 = arith.constant 0 : i32
    return %arg0, %c0_i32 : i32, i32
  }
  func.func @transform_1(%arg0: i32) -> (i32, i32) {
    %c0_i32 = arith.constant 0 : i32
    %c0_i32_0 = arith.constant 0 : i32
    %c0_i32_1 = arith.constant 0 : i32
    return %c0_i32, %c0_i32_0 : i32, i32
  }
  func.func @transform_2(%arg0: i32) -> (i32, i32) {
    %c0_i32 = arith.constant 0 : i32
    %c0_i32_0 = arith.constant 0 : i32
    %c0_i32_1 = arith.constant 0 : i32
    return %c0_i32, %c0_i32_0 : i32, i32
  }
  func.func @transform_3(%arg0: i32) -> (i32, i32) {
    %c0_i32 = arith.constant 0 : i32
    %c0_i32_0 = arith.constant 0 : i32
    return %arg0, %c0_i32 : i32, i32
  }
}

</mosaic_0001>

<llo_original>
// kernel: tpu_custom_call.1
$region0: #{tpu_custom_call.1}
  #allocation0 [shape = 'u32[]', space=smem, size = 0x4, offset = 0x4, fixed_abs, tag = 'smem constant byte address 0x4 - core index']
  #allocation1 [shape = 'u32[144,128]{1,0:T(1,128)}', space=vmem, size = 0x12000, scoped, tag = 'internal scratch']
  %s0 = inlined_call_operand.hbm [shape: bf16[128,128], index: 0, kind: input, shape index: {}]
  %s1 = inlined_call_operand.hbm [shape: bf16[128,128], index: 1, kind: input, shape index: {}]
  %s2 = inlined_call_operand.vmem [shape: f32[1,128], index: 2, kind: input, shape index: {}]
  %s3 = inlined_call_operand.hbm [shape: f32[128,128], index: 3, kind: output, shape index: {}]
  %s4 = sld [smem:[#allocation0]]
  $region53: #{tpu_custom_call.1} parent=0
    _
  %s6 = ssub.s32 1, %s4
  %s7 = scalar_select 0, %s6, %s4
  $region1: #{tpu_custom_call.1} parent=0
    #allocation2 [shape = 'u8[32768]{0}', space=vmem, size = 0x8000, scoped, tag = 'input window, operand 0']
    #allocation3 [shape = 's32[2]{0}', space=sflag, size = 0x8, scoped, tag = 'scoped memory for tpu_custom_call.1']
    #allocation4 [shape = 's32[2]{0}', space=sflag, size = 0x8, scoped, tag = 'scoped memory for tpu_custom_call.1']
    #allocation5 [shape = 'u8[32768]{0}', space=vmem, size = 0x8000, scoped, tag = 'input window, operand 1, single buffered']
    #allocation6 [shape = 's32[1]{0}', space=sflag, size = 0x4, scoped, tag = 'scoped memory for tpu_custom_call.1']
    #allocation7 [shape = 'u8[65536]{0}', space=vmem, size = 0x10000, scoped, tag = 'output window, operand 0']
    %8 = vsyncpa [#allocation3], 0
    %s9 = scalar_lea.sflag [#allocation3], 1
    %10 = vsyncpa %s9, 0
    %11 = vsyncpa [#allocation6], 0
    %12 = vsyncpa [#allocation4], 0
    %s13 = scalar_lea.sflag [#allocation4], 1
    %14 = vsyncpa %s13, 0
    loop: start=0, step=1, limit=4
    $region2: #{tpu_custom_call.1} parent=1 // loop_pre_header
      _
    $region3: #{tpu_custom_call.1} parent=1 // loop_header
      %s16 = sphi 0, %s20
      %p17 = scmp.ge.s32.totalorder %s16, 4
      %s26 = sphi 0, %s28
      %s29 = sphi 0, %s26
      %s30 = sphi 0, %s29
      %s46 = sphi 0, %s30
      %s50 = sphi 0, %s50
      %s52 = sphi 0, %s50
      %s53 = sphi 0, %s52
      %s67 = sphi 0, %s53
      %s71 = sphi 0, %s71
      %s73 = sphi 0, %s71
      %s74 = sphi 0, %s73
      %s88 = sphi 0, %s74
      %s94 = sphi 0, %s96
      %s97 = sphi 0, %s94
      %s98 = sphi 0, %s97
      %s114 = sphi 0, %s98
    $region4: #{tpu_custom_call.1} parent=1 // loop_header_branch
      %19 = sbr.rel (%p17) target = $region8
    $region5: #{tpu_custom_call.1} parent=1 // loop_body
      %s21 = ssub.s32 %s16, 1
      %s22 = ssub.s32 %s16, 2
      %s23 = sadd.s32 %s16, 1
      %s24 = ssub.s32 %s16, %s23
      %p25 = scmp.eq.s32.totalorder %s24, 0
      %s27 = sadd.s32 %s26, 1
      %s28 = scalar_select %p25, %s26, %s27
      %p31 = pneg %p25
      %p32 = scmp.eq.s32.totalorder %s16, 1
      %p33 = por %p31, %p32
      %p34 = scmp.ne.s32.totalorder %s26, %s29
      %p35 = scmp.eq.s32.totalorder %s16, 0
      %p36 = por %p34, %p35
      %p37 = scmp.ne.s32.totalorder %s26, %s29
      %p38 = scmp.eq.s32.totalorder %s21, 1
      %p39 = por %p37, %p38
      %p40 = scmp.ne.s32.totalorder %s29, %s30
      %p41 = scmp.eq.s32.totalorder %s21, 0
      %p42 = por %p40, %p41
      %p43 = scmp.ne.s32.totalorder %s29, %s30
      %p44 = scmp.eq.s32.totalorder %s22, 1
      %p45 = por %p43, %p44
      %p47 = scmp.ne.s32.totalorder %s30, %s46
      %p48 = scmp.eq.s32.totalorder %s22, 0
      %p49 = por %p47, %p48
      %s51 = sadd.s32 %s50, 1
      %p54 = scmp.eq.s32.totalorder %s16, 1
      %p55 = scmp.ne.s32.totalorder %s50, %s52
      %p56 = scmp.eq.s32.totalorder %s16, 0
      %p57 = por %p55, %p56
      %p58 = scmp.ne.s32.totalorder %s50, %s52
      %p59 = scmp.eq.s32.totalorder %s21, 1
      %p60 = por %p58, %p59
      %p61 = scmp.ne.s32.totalorder %s52, %s53
      %p62 = scmp.eq.s32.totalorder %s21, 0
      %p63 = por %p61, %p62
      %p64 = scmp.ne.s32.totalorder %s52, %s53
      %p65 = scmp.eq.s32.totalorder %s22, 1
      %p66 = por %p64, %p65
      %p68 = scmp.ne.s32.totalorder %s53, %s67
      %p69 = scmp.eq.s32.totalorder %s22, 0
      %p70 = por %p68, %p69
      %s72 = sadd.s32 %s71, 1
      %p75 = scmp.eq.s32.totalorder %s16, 1
      %p76 = scmp.ne.s32.totalorder %s71, %s73
      %p77 = scmp.eq.s32.totalorder %s16, 0
      %p78 = por %p76, %p77
      %p79 = scmp.ne.s32.totalorder %s71, %s73
      %p80 = scmp.eq.s32.totalorder %s21, 1
      %p81 = por %p79, %p80
      %p82 = scmp.ne.s32.totalorder %s73, %s74
      %p83 = scmp.eq.s32.totalorder %s21, 0
      %p84 = por %p82, %p83
      %p85 = scmp.ne.s32.totalorder %s73, %s74
      %p86 = scmp.eq.s32.totalorder %s22, 1
      %p87 = por %p85, %p86
      %p89 = scmp.ne.s32.totalorder %s74, %s88
      %p90 = scmp.eq.s32.totalorder %s22, 0
      %p91 = por %p89, %p90
      %s92 = ssub.s32 %s16, %s23
      %p93 = scmp.eq.s32.totalorder %s92, 0
      %s95 = sadd.s32 %s94, 1
      %s96 = scalar_select %p93, %s94, %s95
      %p99 = pneg %p93
      %p100 = scmp.eq.s32.totalorder %s16, 1
      %p101 = por %p99, %p100
      %p102 = scmp.ne.s32.totalorder %s94, %s97
      %p103 = scmp.eq.s32.totalorder %s16, 0
      %p104 = por %p102, %p103
      %p105 = scmp.ne.s32.totalorder %s94, %s97
      %p106 = scmp.eq.s32.totalorder %s21, 1
      %p107 = por %p105, %p106
      %p108 = scmp.ne.s32.totalorder %s97, %s98
      %p109 = scmp.eq.s32.totalorder %s21, 0
      %p110 = por %p108, %p109
      %p111 = scmp.ne.s32.totalorder %s97, %s98
      %p112 = scmp.eq.s32.totalorder %s22, 1
      %p113 = por %p111, %p112
      %p115 = scmp.ne.s32.totalorder %s98, %s114
      %p116 = scmp.eq.s32.totalorder %s22, 0
      %p117 = por %p115, %p116
      %p118 = scmp.le.s32.totalorder 1, %s16
      %p119 = scmp.lt.s32.totalorder %s16, 3
      %p120 = pnand %p118, %p119
      %p121 = pneg %p120
      // Predicated region
      $region9: #{tpu_custom_call.1} parent=5 // pred_check
        _
      $region10: #{tpu_custom_call.1} parent=5 // pred_check_branch
        %123 = sbr.rel (%p120) target = $region12
      $region11: #{tpu_custom_call.1} parent=5 // pred_region
        %s124 = ssub.s32 %s16, 1
        // Predicated region
        $region13: #{tpu_custom_call.1} parent=11 // pred_check
          %p125 = pneg %p63
        $region14: #{tpu_custom_call.1} parent=11 // pred_check_branch
          %127 = sbr.rel (%p125) target = $region16
        $region15: #{tpu_custom_call.1} parent=11 // pred_region
          %s129 = ssub.s32 1024, 1024
          %130 = vsyncadd [#allocation6], %s129
          %s131 = sshll.u32 [#allocation5], 4
          %s132 = int_to_ptr.vmem [resolvable:$true] %s131
          %137 = dma.hbm_to_vmem [thread:$0]  %s1, 1024, %s132, [#allocation6], 64, 64, 4
        $region16: #{tpu_custom_call.1} parent=11 // pred_fallthru
          _
        // Predicated region
        $region17: #{tpu_custom_call.1} parent=11 // pred_check
          %p138 = pneg %p84
        $region18: #{tpu_custom_call.1} parent=11 // pred_check_branch
          %140 = sbr.rel (%p138) target = $region20
        $region19: #{tpu_custom_call.1} parent=11 // pred_region
          _
        $region20: #{tpu_custom_call.1} parent=11 // pred_fallthru
          _
      $region12: #{tpu_custom_call.1} parent=5 // pred_fallthru
        _
      %p141 = scmp.lt.s32.totalorder %s16, 2
      // Predicated region
      $region21: #{tpu_custom_call.1} parent=5 // pred_check
        %p142 = pneg %p141
      $region22: #{tpu_custom_call.1} parent=5 // pred_check_branch
        %144 = sbr.rel (%p142) target = $region24
      $region23: #{tpu_custom_call.1} parent=5 // pred_region
        // Predicated region
        $region25: #{tpu_custom_call.1} parent=23 // pred_check
          %p145 = pneg %p36
        $region26: #{tpu_custom_call.1} parent=23 // pred_check_branch
          %147 = sbr.rel (%p145) target = $region28
        $region27: #{tpu_custom_call.1} parent=23 // pred_region
          %s148 = sand.u32 %s26, 1
          %s149 = scalar_lea.sflag [#allocation3], %s148
          %s150 = sand.u32 %s26, 1
          %s151 = smul.addr %s150, 32
          %s152 = scalar_lea.vmem [#allocation2], %s151
          %s153 = smul.u32 8, %s16
          %s155 = ssub.s32 512, 512
          %156 = vsyncadd %s149, %s155
          %s157 = smul.addr %s153, 64
          %s158 = scalar_lea.hbm %s0, %s157
          %s159 = sshll.u32 %s152, 4
          %s160 = int_to_ptr.vmem [resolvable:$true] %s159
          %165 = dma.hbm_to_vmem [thread:$0]  %s158, 512, %s160, %s149, 64, 64, 4
        $region28: #{tpu_custom_call.1} parent=23 // pred_fallthru
          _
      $region24: #{tpu_custom_call.1} parent=5 // pred_fallthru
        _
      %p166 = scmp.le.s32.totalorder 1, %s16
      %p167 = scmp.lt.s32.totalorder %s16, 3
      %p168 = pnand %p166, %p167
      %p169 = pneg %p168
      // Predicated region
      $region29: #{tpu_custom_call.1} parent=5 // pred_check
        _
      $region30: #{tpu_custom_call.1} parent=5 // pred_check_branch
        %171 = sbr.rel (%p168) target = $region32
      $region31: #{tpu_custom_call.1} parent=5 // pred_region
        %s172 = ssub.s32 %s16, 1
        %s173 = sand.u32 %s29, 1
        %s174 = scalar_lea.sflag [#allocation3], %s173
        %s175 = sand.u32 %s29, 1
        %s176 = smul.addr %s175, 32
        %s177 = scalar_lea.vmem [#allocation2], %s176
        // Predicated region
        $region33: #{tpu_custom_call.1} parent=31 // pred_check
          %p178 = pneg %p42
        $region34: #{tpu_custom_call.1} parent=31 // pred_check_branch
          %180 = sbr.rel (%p178) target = $region36
        $region35: #{tpu_custom_call.1} parent=31 // pred_region
          %181 = dma.done %s174, 512
        $region36: #{tpu_custom_call.1} parent=31 // pred_fallthru
          _
        // Predicated region
        $region37: #{tpu_custom_call.1} parent=31 // pred_check
          %p182 = pneg %p63
        $region38: #{tpu_custom_call.1} parent=31 // pred_check_branch
          %184 = sbr.rel (%p182) target = $region40
        $region39: #{tpu_custom_call.1} parent=31 // pred_region
          %185 = dma.done [#allocation6], 1024
        $region40: #{tpu_custom_call.1} parent=31 // pred_fallthru
          _
        %s186 = sand.u32 %s29, 1
        %s187 = scalar_lea.sflag [#allocation3], %s186
        %s188 = sand.u32 %s29, 1
        %s189 = smul.addr %s188, 32
        %s190 = scalar_lea.vmem [#allocation2], %s189
        %p191 = pneg %p42
        %p192 = pneg %p39
        %p193 = pneg %p63
        %p194 = pneg %p60
        %p195 = pneg %p84
        %p196 = pneg %p81
        %p197 = pneg %p110
        %p198 = pneg %p107
        %s199 = sand.u32 %s97, 1
        %s200 = scalar_lea.sflag [#allocation4], %s199
        %s201 = sand.u32 %s97, 1
        %s202 = smul.addr %s201, 64
        %s203 = scalar_lea.vmem [#allocation7], %s202
        %s204 = smul.u32 8, %s21
        %s205 = smul.u32 8, %s21
        %v207 = vld [vmem:[%s177] sm:$0xf]
        %v208 = vld [vmem:[%s177 + $0x4] sm:$0xf]
        %v209 = vld [vmem:[%s177 + $0x8] sm:$0xf]
        %v210 = vld [vmem:[%s177 + $0xc] sm:$0xf]
        %v211 = vld [vmem:[%s177 + $0x10] sm:$0xf]
        %v212 = vld [vmem:[%s177 + $0x14] sm:$0xf]
        %v213 = vld [vmem:[%s177 + $0x18] sm:$0xf]
        %v214 = vld [vmem:[%s177 + $0x1c] sm:$0xf]
        %v215 = vld [vmem:[#allocation5] sm:$0xf]
        %v216 = vld [vmem:[#allocation5 + $0x4] sm:$0xf]
        %v217 = vld [vmem:[#allocation5 + $0x8] sm:$0xf]
        %v218 = vld [vmem:[#allocation5 + $0xc] sm:$0xf]
        %v219 = vld [vmem:[#allocation5 + $0x10] sm:$0xf]
        %v220 = vld [vmem:[#allocation5 + $0x14] sm:$0xf]
        %v221 = vld [vmem:[#allocation5 + $0x18] sm:$0xf]
        %v222 = vld [vmem:[#allocation5 + $0x1c] sm:$0xf]
        %v223 = vld [vmem:[#allocation5 + $0x20] sm:$0xf]
        %v224 = vld [vmem:[#allocation5 + $0x24] sm:$0xf]
        %v225 = vld [vmem:[#allocation5 + $0x28] sm:$0xf]
        %v226 = vld [vmem:[#allocation5 + $0x2c] sm:$0xf]
        %v227 = vld [vmem:[#allocation5 + $0x30] sm:$0xf]
        %v228 = vld [vmem:[#allocation5 + $0x34] sm:$0xf]
        %v229 = vld [vmem:[#allocation5 + $0x38] sm:$0xf]
        %v230 = vld [vmem:[#allocation5 + $0x3c] sm:$0xf]
        %v231 = vld [vmem:[%s2] sm:$0x1]
        %v233 = vlaneseq
        %v234 = vshrl.u32 %v233, 7
        %v235 = vsub.s32 0, %v234
        %v236 = vrot.slane %v231, %v235
        %v246 = vunpack.c.l.b16 %v207
        %v247 = vunpack.c.l.b16 %v208
        %v248 = vunpack.c.l.b16 %v209
        %v249 = vunpack.c.l.b16 %v210
        %v250 = vunpack.c.l.b16 %v211
        %v251 = vunpack.c.l.b16 %v212
        %v252 = vunpack.c.l.b16 %v213
        %v253 = vunpack.c.l.b16 %v214
        %v254 = vpack.c.b16 %v247, %v246
        %v255 = vpack.c.b16 %v249, %v248
        %v256 = vpack.c.b16 %v251, %v250
        %v257 = vpack.c.b16 %v253, %v252
        %v278 = vunpack.c.l.b16 %v215
        %v279 = vunpack.c.l.b16 %v216
        %v280 = vunpack.c.l.b16 %v217
        %v281 = vunpack.c.l.b16 %v218
        %v282 = vunpack.c.l.b16 %v219
        %v283 = vunpack.c.l.b16 %v220
        %v284 = vunpack.c.l.b16 %v221
        %v285 = vunpack.c.l.b16 %v222
        %v286 = vunpack.c.l.b16 %v223
        %v287 = vunpack.c.l.b16 %v224
        %v288 = vunpack.c.l.b16 %v225
        %v289 = vunpack.c.l.b16 %v226
        %v290 = vunpack.c.l.b16 %v227
        %v291 = vunpack.c.l.b16 %v228
        %v292 = vunpack.c.l.b16 %v229
        %v293 = vunpack.c.l.b16 %v230
        %v294 = vpack.c.b16 %v279, %v278
        %v295 = vpack.c.b16 %v281, %v280
        %v296 = vpack.c.b16 %v283, %v282
        %v297 = vpack.c.b16 %v285, %v284
        %v298 = vpack.c.b16 %v287, %v286
        %v299 = vpack.c.b16 %v289, %v288
        %v300 = vpack.c.b16 %v291, %v290
        %v301 = vpack.c.b16 %v293, %v292
        %310 = vmatprep.subr.bf16.mxu0 0
        %311 = vmatpush1.bf16.msra.mxu0 %v294
        %312 = vmatprep.subr.bf16.mxu0 0
        %313 = vmatpush1.bf16.msra.mxu0 %v295
        %314 = vmatprep.subr.bf16.mxu0 0
        %315 = vmatpush1.bf16.msra.mxu0 %v296
        %316 = vmatprep.subr.bf16.mxu0 0
        %317 = vmatpush1.bf16.msra.mxu0 %v297
        %318 = vmatprep.subr.bf16.mxu0 0
        %319 = vmatpush1.bf16.msra.mxu0 %v298
        %320 = vmatprep.subr.bf16.mxu0 0
        %321 = vmatpush1.bf16.msra.mxu0 %v299
        %322 = vmatprep.subr.bf16.mxu0 0
        %323 = vmatpush1.bf16.msra.mxu0 %v300
        %324 = vmatprep.subr.bf16.mxu0 0
        %325 = vmatpush1.bf16.msra.mxu0 %v301
        %326 = vmatprep.subr.bf16.mxu0 0
        %327 = vmatpush1.bf16.msra.mxu0 0
        %328 = vmatprep.subr.bf16.mxu0 0
        %329 = vmatpush1.bf16.msra.mxu0 0
        %330 = vmatprep.subr.bf16.mxu0 0
        %331 = vmatpush1.bf16.msra.mxu0 0
        %332 = vmatprep.subr.bf16.mxu0 0
        %333 = vmatpush1.bf16.msra.mxu0 0
        %334 = vmatprep.subr.bf16.mxu0 0
        %335 = vmatpush1.bf16.msra.mxu0 0
        %336 = vmatprep.subr.bf16.mxu0 0
        %337 = vmatpush1.bf16.msra.mxu0 0
        %338 = vmatprep.subr.bf16.mxu0 0
        %339 = vmatpush1.bf16.msra.mxu0 0
        %340 = vmatprep.subr.bf16.mxu0 0
        %341 = vmatpush1.bf16.msra.mxu0 0
        %342 = vmatprep.mubr.bf16.mxu0 0
        %343 = vmatmul.mubr.bf16.gmra.mrb[0].mxu0 %v254
        %v344 = vpop.f32.mrb[0].mxu0
        %v345 = vadd.f32 %v236, %v344
        %v346 = vpop.f32.mrb[0].mxu0
        %v347 = vpop.f32.mrb[0].mxu0
        %v348 = vadd.f32 %v236, %v347
        %v349 = vpop.f32.mrb[0].mxu0
        %350 = vmatprep.mubr.bf16.mxu0 0
        %351 = vmatmul.mubr.bf16.gmra.mrb[0].mxu0 %v255
        %v352 = vpop.f32.mrb[0].mxu0
        %v353 = vadd.f32 %v236, %v352
        %v354 = vpop.f32.mrb[0].mxu0
        %v355 = vpop.f32.mrb[0].mxu0
        %v356 = vadd.f32 %v236, %v355
        %v357 = vpop.f32.mrb[0].mxu0
        %358 = vmatprep.mubr.bf16.mxu0 0
        %359 = vmatmul.mubr.bf16.gmra.mrb[0].mxu0 %v256
        %v360 = vpop.f32.mrb[0].mxu0
        %v361 = vadd.f32 %v236, %v360
        %v362 = vpop.f32.mrb[0].mxu0
        %v363 = vpop.f32.mrb[0].mxu0
        %v364 = vadd.f32 %v236, %v363
        %v365 = vpop.f32.mrb[0].mxu0
        %366 = vmatprep.mubr.bf16.mxu0 0
        %367 = vmatmul.mubr.bf16.gmra.mrb[0].mxu0 %v257
        %v368 = vpop.f32.mrb[0].mxu0
        %v369 = vadd.f32 %v236, %v368
        %v370 = vpop.f32.mrb[0].mxu0
        %v371 = vpop.f32.mrb[0].mxu0
        %v372 = vadd.f32 %v236, %v371
        %v373 = vpop.f32.mrb[0].mxu0
        %374 = vdwg.mxu0
        %v375 = vmax.f32 %v345, 0.0
        %v376 = vmax.f32 %v348, 0.0
        %v377 = vmax.f32 %v353, 0.0
        %v378 = vmax.f32 %v356, 0.0
        %v379 = vmax.f32 %v361, 0.0
        %v380 = vmax.f32 %v364, 0.0
        %v381 = vmax.f32 %v369, 0.0
        %v382 = vmax.f32 %v372, 0.0
        %383 = vst [vmem:[%s203] sm:$0xff] %v375
        %384 = vst [vmem:[%s203 + $0x8] sm:$0xff] %v376
        %385 = vst [vmem:[%s203 + $0x10] sm:$0xff] %v377
        %386 = vst [vmem:[%s203 + $0x18] sm:$0xff] %v378
        %387 = vst [vmem:[%s203 + $0x20] sm:$0xff] %v379
        %388 = vst [vmem:[%s203 + $0x28] sm:$0xff] %v380
        %389 = vst [vmem:[%s203 + $0x30] sm:$0xff] %v381
        %390 = vst [vmem:[%s203 + $0x38] sm:$0xff] %v382
        %s391 = sand.u32 %s97, 1
        %s392 = scalar_lea.sflag [#allocation4], %s391
        %s393 = sand.u32 %s97, 1
        %s394 = smul.addr %s393, 64
        %s395 = scalar_lea.vmem [#allocation7], %s394
        // Predicated region
        $region41: #{tpu_custom_call.1} parent=31 // pred_check
          %p396 = pneg %p107
        $region42: #{tpu_custom_call.1} parent=31 // pred_check_branch
          %398 = sbr.rel (%p396) target = $region44
        $region43: #{tpu_custom_call.1} parent=31 // pred_region
          %s399 = smul.u32 8, %s21
          %s401 = ssub.s32 1024, 1024
          %402 = vsyncadd %s392, %s401
          %s403 = smul.addr %s399, 128
          %s404 = scalar_lea.hbm %s3, %s403
          %s405 = sshll.u32 %s395, 4
          %s406 = int_to_ptr.vmem [resolvable:$true] %s405
          %411 = dma.vmem_to_hbm [thread:$0]  %s406, 1024, %s404, %s392, 128, 128, 8
        $region44: #{tpu_custom_call.1} parent=31 // pred_fallthru
          _
      $region32: #{tpu_custom_call.1} parent=5 // pred_fallthru
        _
      %p412 = scmp.le.s32.totalorder 2, %s16
      // Predicated region
      $region45: #{tpu_custom_call.1} parent=5 // pred_check
        %p413 = pneg %p412
      $region46: #{tpu_custom_call.1} parent=5 // pred_check_branch
        %415 = sbr.rel (%p413) target = $region48
      $region47: #{tpu_custom_call.1} parent=5 // pred_region
        %s416 = ssub.s32 %s16, 2
        // Predicated region
        $region49: #{tpu_custom_call.1} parent=47 // pred_check
          %p417 = pneg %p113
        $region50: #{tpu_custom_call.1} parent=47 // pred_check_branch
          %419 = sbr.rel (%p417) target = $region52
        $region51: #{tpu_custom_call.1} parent=47 // pred_region
          %s420 = sand.u32 %s98, 1
          %s421 = scalar_lea.sflag [#allocation4], %s420
          %s422 = sand.u32 %s98, 1
          %s423 = smul.addr %s422, 64
          %s424 = scalar_lea.vmem [#allocation7], %s423
          %425 = dma.done %s421, 1024
        $region52: #{tpu_custom_call.1} parent=47 // pred_fallthru
          _
      $region48: #{tpu_custom_call.1} parent=5 // pred_fallthru
        _
    $region6: #{tpu_custom_call.1} parent=1 // loop_footer
      %s20 = sadd.s32 1, %s16
    $region7: #{tpu_custom_call.1} parent=1 // loop_footer_branch
      %15 = sbr.rel target = $region3
    $region8: #{tpu_custom_call.1} parent=1 // loop_exit
      _
    %426 = vsyncpa [#allocation3], 1
    %s427 = scalar_lea.sflag [#allocation3], 1
    %428 = vsyncpa %s427, 1
    %429 = vsyncpa [#allocation6], 1
    %430 = vsyncpa [#allocation4], 1
    %s431 = scalar_lea.sflag [#allocation4], 1
    %432 = vsyncpa %s431, 1

// kernel: tpu_custom_call.1
$region0: #{tpu_custom_call.1}
  #allocation0 [shape = 'u32[]', space=smem, size = 0x4, offset = 0x4, fixed_abs, tag = 'smem constant byte address 0x4 - core index']
  #allocation1 [shape = 'u32[144,128]{1,0:T(1,128)}', space=vmem, size = 0x12000, scoped, tag = 'internal scratch']
  %s0 = inlined_call_operand.hbm [shape: bf16[128,128], index: 0, kind: input, shape index: {}]
  %s1 = inlined_call_operand.hbm [shape: bf16[128,128], index: 1, kind: input, shape index: {}]
  %s2 = inlined_call_operand.vmem [shape: f32[1,128], index: 2, kind: input, shape index: {}]
  %s3 = inlined_call_operand.hbm [shape: f32[128,128], index: 3, kind: output, shape index: {}]
  %s4 = sld [smem:[#allocation0]]
  $region53: #{tpu_custom_call.1} parent=0
    _
  %s6 = ssub.s32 1, %s4
  %s7 = scalar_select 0, %s6, %s4
  $region1: #{tpu_custom_call.1} parent=0
    #allocation2 [shape = 'u8[32768]{0}', space=vmem, size = 0x8000, scoped, tag = 'input window, operand 0']
    #allocation3 [shape = 's32[2]{0}', space=sflag, size = 0x8, scoped, tag = 'scoped memory for tpu_custom_call.1']
    #allocation4 [shape = 's32[2]{0}', space=sflag, size = 0x8, scoped, tag = 'scoped memory for tpu_custom_call.1']
    #allocation5 [shape = 'u8[32768]{0}', space=vmem, size = 0x8000, scoped, tag = 'input window, operand 1, single buffered']
    #allocation6 [shape = 's32[1]{0}', space=sflag, size = 0x4, scoped, tag = 'scoped memory for tpu_custom_call.1']
    #allocation7 [shape = 'u8[65536]{0}', space=vmem, size = 0x10000, scoped, tag = 'output window, operand 0']
    %8 = vsyncpa [#allocation3], 0
    %s9 = scalar_lea.sflag [#allocation3], 1
    %10 = vsyncpa %s9, 0
    %11 = vsyncpa [#allocation6], 0
    %12 = vsyncpa [#allocation4], 0
    %s13 = scalar_lea.sflag [#allocation4], 1
    %14 = vsyncpa %s13, 0
    loop: start=0, step=1, limit=4
    $region2: #{tpu_custom_call.1} parent=1 // loop_pre_header
      _
    $region3: #{tpu_custom_call.1} parent=1 // loop_header
      %s16 = sphi 0, %s20
      %p17 = scmp.ge.s32.totalorder %s16, 4
      %s26 = sphi 0, %s28
      %s29 = sphi 0, %s26
      %s30 = sphi 0, %s29
      %s46 = sphi 0, %s30
      %s50 = sphi 0, %s50
      %s52 = sphi 0, %s50
      %s53 = sphi 0, %s52
      %s67 = sphi 0, %s53
      %s71 = sphi 0, %s71
      %s73 = sphi 0, %s71
      %s74 = sphi 0, %s73
      %s88 = sphi 0, %s74
      %s94 = sphi 0, %s96
      %s97 = sphi 0, %s94
      %s98 = sphi 0, %s97
      %s114 = sphi 0, %s98
    $region4: #{tpu_custom_call.1} parent=1 // loop_header_branch
      %19 = sbr.rel (%p17) target = $region8
    $region5: #{tpu_custom_call.1} parent=1 // loop_body
      %s21 = ssub.s32 %s16, 1
      %s22 = ssub.s32 %s16, 2
      %s23 = sadd.s32 %s16, 1
      %s24 = ssub.s32 %s16, %s23
      %p25 = scmp.eq.s32.totalorder %s24, 0
      %s27 = sadd.s32 %s26, 1
      %s28 = scalar_select %p25, %s26, %s27
      %p31 = pneg %p25
      %p32 = scmp.eq.s32.totalorder %s16, 1
      %p33 = por %p31, %p32
      %p34 = scmp.ne.s32.totalorder %s26, %s29
      %p35 = scmp.eq.s32.totalorder %s16, 0
      %p36 = por %p34, %p35
      %p37 = scmp.ne.s32.totalorder %s26, %s29
      %p38 = scmp.eq.s32.totalorder %s21, 1
      %p39 = por %p37, %p38
      %p40 = scmp.ne.s32.totalorder %s29, %s30
      %p41 = scmp.eq.s32.totalorder %s21, 0
      %p42 = por %p40, %p41
      %p43 = scmp.ne.s32.totalorder %s29, %s30
      %p44 = scmp.eq.s32.totalorder %s22, 1
      %p45 = por %p43, %p44
      %p47 = scmp.ne.s32.totalorder %s30, %s46
      %p48 = scmp.eq.s32.totalorder %s22, 0
      %p49 = por %p47, %p48
      %s51 = sadd.s32 %s50, 1
      %p54 = scmp.eq.s32.totalorder %s16, 1
      %p55 = scmp.ne.s32.totalorder %s50, %s52
      %p56 = scmp.eq.s32.totalorder %s16, 0
      %p57 = por %p55, %p56
      %p58 = scmp.ne.s32.totalorder %s50, %s52
      %p59 = scmp.eq.s32.totalorder %s21, 1
      %p60 = por %p58, %p59
      %p61 = scmp.ne.s32.totalorder %s52, %s53
      %p62 = scmp.eq.s32.totalorder %s21, 0
      %p63 = por %p61, %p62
      %p64 = scmp.ne.s32.totalorder %s52, %s53
      %p65 = scmp.eq.s32.totalorder %s22, 1
      %p66 = por %p64, %p65
      %p68 = scmp.ne.s32.totalorder %s53, %s67
      %p69 = scmp.eq.s32.totalorder %s22, 0
      %p70 = por %p68, %p69
      %s72 = sadd.s32 %s71, 1
      %p75 = scmp.eq.s32.totalorder %s16, 1
      %p76 = scmp.ne.s32.totalorder %s71, %s73
      %p77 = scmp.eq.s32.totalorder %s16, 0
      %p78 = por %p76, %p77
      %p79 = scmp.ne.s32.totalorder %s71, %s73
      %p80 = scmp.eq.s32.totalorder %s21, 1
      %p81 = por %p79, %p80
      %p82 = scmp.ne.s32.totalorder %s73, %s74
      %p83 = scmp.eq.s32.totalorder %s21, 0
      %p84 = por %p82, %p83
      %p85 = scmp.ne.s32.totalorder %s73, %s74
      %p86 = scmp.eq.s32.totalorder %s22, 1
      %p87 = por %p85, %p86
      %p89 = scmp.ne.s32.totalorder %s74, %s88
      %p90 = scmp.eq.s32.totalorder %s22, 0
      %p91 = por %p89, %p90
      %s92 = ssub.s32 %s16, %s23
      %p93 = scmp.eq.s32.totalorder %s92, 0
      %s95 = sadd.s32 %s94, 1
      %s96 = scalar_select %p93, %s94, %s95
      %p99 = pneg %p93
      %p100 = scmp.eq.s32.totalorder %s16, 1
      %p101 = por %p99, %p100
      %p102 = scmp.ne.s32.totalorder %s94, %s97
      %p103 = scmp.eq.s32.totalorder %s16, 0
      %p104 = por %p102, %p103
      %p105 = scmp.ne.s32.totalorder %s94, %s97
      %p106 = scmp.eq.s32.totalorder %s21, 1
      %p107 = por %p105, %p106
      %p108 = scmp.ne.s32.totalorder %s97, %s98
      %p109 = scmp.eq.s32.totalorder %s21, 0
      %p110 = por %p108, %p109
      %p111 = scmp.ne.s32.totalorder %s97, %s98
      %p112 = scmp.eq.s32.totalorder %s22, 1
      %p113 = por %p111, %p112
      %p115 = scmp.ne.s32.totalorder %s98, %s114
      %p116 = scmp.eq.s32.totalorder %s22, 0
      %p117 = por %p115, %p116
      %p118 = scmp.le.s32.totalorder 1, %s16
      %p119 = scmp.lt.s32.totalorder %s16, 3
      %p120 = pnand %p118, %p119
      %p121 = pneg %p120
      // Predicated region
      $region9: #{tpu_custom_call.1} parent=5 // pred_check
        _
      $region10: #{tpu_custom_call.1} parent=5 // pred_check_branch
        %123 = sbr.rel (%p120) target = $region12
      $region11: #{tpu_custom_call.1} parent=5 // pred_region
        %s124 = ssub.s32 %s16, 1
        // Predicated region
        $region13: #{tpu_custom_call.1} parent=11 // pred_check
          %p125 = pneg %p63
        $region14: #{tpu_custom_call.1} parent=11 // pred_check_branch
          %127 = sbr.rel (%p125) target = $region16
        $region15: #{tpu_custom_call.1} parent=11 // pred_region
          %s129 = ssub.s32 1024, 1024
          %130 = vsyncadd [#allocation6], %s129
          %s131 = sshll.u32 [#allocation5], 4
          %s132 = int_to_ptr.vmem [resolvable:$true] %s131
          %137 = dma.hbm_to_vmem [thread:$0]  %s1, 1024, %s132, [#allocation6], 64, 64, 4
        $region16: #{tpu_custom_call.1} parent=11 // pred_fallthru
          _
        // Predicated region
        $region17: #{tpu_custom_call.1} parent=11 // pred_check
          %p138 = pneg %p84
        $region18: #{tpu_custom_call.1} parent=11 // pred_check_branch
          %140 = sbr.rel (%p138) target = $region20
        $region19: #{tpu_custom_call.1} parent=11 // pred_region
          _
        $region20: #{tpu_custom_call.1} parent=11 // pred_fallthru
          _
      $region12: #{tpu_custom_call.1} parent=5 // pred_fallthru
        _
      %p141 = scmp.lt.s32.totalorder %s16, 2
      // Predicated region
      $region21: #{tpu_custom_call.1} parent=5 // pred_check
        %p142 = pneg %p141
      $region22: #{tpu_custom_call.1} parent=5 // pred_check_branch
        %144 = sbr.rel (%p142) target = $region24
      $region23: #{tpu_custom_call.1} parent=5 // pred_region
        // Predicated region
        $region25: #{tpu_custom_call.1} parent=23 // pred_check
          %p145 = pneg %p36
        $region26: #{tpu_custom_call.1} parent=23 // pred_check_branch
          %147 = sbr.rel (%p145) target = $region28
        $region27: #{tpu_custom_call.1} parent=23 // pred_region
          %s148 = sand.u32 %s26, 1
          %s149 = scalar_lea.sflag [#allocation3], %s148
          %s150 = sand.u32 %s26, 1
          %s151 = smul.addr %s150, 32
          %s152 = scalar_lea.vmem [#allocation2], %s151
          %s153 = smul.u32 8, %s16
          %s155 = ssub.s32 512, 512
          %156 = vsyncadd %s149, %s155
          %s157 = smul.addr %s153, 64
          %s158 = scalar_lea.hbm %s0, %s157
          %s159 = sshll.u32 %s152, 4
          %s160 = int_to_ptr.vmem [resolvable:$true] %s159
          %165 = dma.hbm_to_vmem [thread:$0]  %s158, 512, %s160, %s149, 64, 64, 4
        $region28: #{tpu_custom_call.1} parent=23 // pred_fallthru
          _
      $region24: #{tpu_custom_call.1} parent=5 // pred_fallthru
        _
      %p166 = scmp.le.s32.totalorder 1, %s16
      %p167 = scmp.lt.s32.totalorder %s16, 3
      %p168 = pnand %p166, %p167
      %p169 = pneg %p168
      // Predicated region
      $region29: #{tpu_custom_call.1} parent=5 // pred_check
        _
      $region30: #{tpu_custom_call.1} parent=5 // pred_check_branch
        %171 = sbr.rel (%p168) target = $region32
      $region31: #{tpu_custom_call.1} parent=5 // pred_region
        %s172 = ssub.s32 %s16, 1
        %s173 = sand.u32 %s29, 1
        %s174 = scalar_lea.sflag [#allocation3], %s173
        %s175 = sand.u32 %s29, 1
        %s176 = smul.addr %s175, 32
        %s177 = scalar_lea.vmem [#allocation2], %s176
        // Predicated region
        $region33: #{tpu_custom_call.1} parent=31 // pred_check
          %p178 = pneg %p42
        $region34: #{tpu_custom_call.1} parent=31 // pred_check_branch
          %180 = sbr.rel (%p178) target = $region36
        $region35: #{tpu_custom_call.1} parent=31 // pred_region
          %181 = dma.done %s174, 512
        $region36: #{tpu_custom_call.1} parent=31 // pred_fallthru
          _
        // Predicated region
        $region37: #{tpu_custom_call.1} parent=31 // pred_check
          %p182 = pneg %p63
        $region38: #{tpu_custom_call.1} parent=31 // pred_check_branch
          %184 = sbr.rel (%p182) target = $region40
        $region39: #{tpu_custom_call.1} parent=31 // pred_region
          %185 = dma.done [#allocation6], 1024
        $region40: #{tpu_custom_call.1} parent=31 // pred_fallthru
          _
        %s186 = sand.u32 %s29, 1
        %s187 = scalar_lea.sflag [#allocation3], %s186
        %s188 = sand.u32 %s29, 1
        %s189 = smul.addr %s188, 32
        %s190 = scalar_lea.vmem [#allocation2], %s189
        %p191 = pneg %p42
        %p192 = pneg %p39
        %p193 = pneg %p63
        %p194 = pneg %p60
        %p195 = pneg %p84
        %p196 = pneg %p81
        %p197 = pneg %p110
        %p198 = pneg %p107
        %s199 = sand.u32 %s97, 1
        %s200 = scalar_lea.sflag [#allocation4], %s199
        %s201 = sand.u32 %s97, 1
        %s202 = smul.addr %s201, 64
        %s203 = scalar_lea.vmem [#allocation7], %s202
        %s204 = smul.u32 8, %s21
        %s205 = smul.u32 8, %s21
        %v207 = vld [vmem:[%s177] sm:$0xf]
        %v208 = vld [vmem:[%s177 + $0x4] sm:$0xf]
        %v209 = vld [vmem:[%s177 + $0x8] sm:$0xf]
        %v210 = vld [vmem:[%s177 + $0xc] sm:$0xf]
        %v211 = vld [vmem:[%s177 + $0x10] sm:$0xf]
        %v212 = vld [vmem:[%s177 + $0x14] sm:$0xf]
        %v213 = vld [vmem:[%s177 + $0x18] sm:$0xf]
        %v214 = vld [vmem:[%s177 + $0x1c] sm:$0xf]
        %v215 = vld [vmem:[#allocation5] sm:$0xf]
        %v216 = vld [vmem:[#allocation5 + $0x4] sm:$0xf]
        %v217 = vld [vmem:[#allocation5 + $0x8] sm:$0xf]
        %v218 = vld [vmem:[#allocation5 + $0xc] sm:$0xf]
        %v219 = vld [vmem:[#allocation5 + $0x10] sm:$0xf]
        %v220 = vld [vmem:[#allocation5 + $0x14] sm:$0xf]
        %v221 = vld [vmem:[#allocation5 + $0x18] sm:$0xf]
        %v222 = vld [vmem:[#allocation5 + $0x1c] sm:$0xf]
        %v223 = vld [vmem:[#allocation5 + $0x20] sm:$0xf]
        %v224 = vld [vmem:[#allocation5 + $0x24] sm:$0xf]
        %v225 = vld [vmem:[#allocation5 + $0x28] sm:$0xf]
        %v226 = vld [vmem:[#allocation5 + $0x2c] sm:$0xf]
        %v227 = vld [vmem:[#allocation5 + $0x30] sm:$0xf]
        %v228 = vld [vmem:[#allocation5 + $0x34] sm:$0xf]
        %v229 = vld [vmem:[#allocation5 + $0x38] sm:$0xf]
        %v230 = vld [vmem:[#allocation5 + $0x3c] sm:$0xf]
        %v231 = vld [vmem:[%s2] sm:$0x1]
        %v233 = vlaneseq
        %v234 = vshrl.u32 %v233, 7
        %v235 = vsub.s32 0, %v234
        %v236 = vrot.slane %v231, %v235
        %v246 = vunpack.c.l.b16 %v207
        %v247 = vunpack.c.l.b16 %v208
        %v248 = vunpack.c.l.b16 %v209
        %v249 = vunpack.c.l.b16 %v210
        %v250 = vunpack.c.l.b16 %v211
        %v251 = vunpack.c.l.b16 %v212
        %v252 = vunpack.c.l.b16 %v213
        %v253 = vunpack.c.l.b16 %v214
        %v254 = vpack.c.b16 %v247, %v246
        %v255 = vpack.c.b16 %v249, %v248
        %v256 = vpack.c.b16 %v251, %v250
        %v257 = vpack.c.b16 %v253, %v252
        %v278 = vunpack.c.l.b16 %v215
        %v279 = vunpack.c.l.b16 %v216
        %v280 = vunpack.c.l.b16 %v217
        %v281 = vunpack.c.l.b16 %v218
        %v282 = vunpack.c.l.b16 %v219
        %v283 = vunpack.c.l.b16 %v220
        %v284 = vunpack.c.l.b16 %v221
        %v285 = vunpack.c.l.b16 %v222
        %v286 = vunpack.c.l.b16 %v223
        %v287 = vunpack.c.l.b16 %v224
        %v288 = vunpack.c.l.b16 %v225
        %v289 = vunpack.c.l.b16 %v226
        %v290 = vunpack.c.l.b16 %v227
        %v291 = vunpack.c.l.b16 %v228
        %v292 = vunpack.c.l.b16 %v229
        %v293 = vunpack.c.l.b16 %v230
        %v294 = vpack.c.b16 %v279, %v278
        %v295 = vpack.c.b16 %v281, %v280
        %v296 = vpack.c.b16 %v283, %v282
        %v297 = vpack.c.b16 %v285, %v284
        %v298 = vpack.c.b16 %v287, %v286
        %v299 = vpack.c.b16 %v289, %v288
        %v300 = vpack.c.b16 %v291, %v290
        %v301 = vpack.c.b16 %v293, %v292
        %310 = vmatprep.subr.bf16.mxu0 0
        %311 = vmatpush1.bf16.msra.mxu0 %v294
        %312 = vmatprep.subr.bf16.mxu0 0
        %313 = vmatpush1.bf16.msra.mxu0 %v295
        %314 = vmatprep.subr.bf16.mxu0 0
        %315 = vmatpush1.bf16.msra.mxu0 %v296
        %316 = vmatprep.subr.bf16.mxu0 0
        %317 = vmatpush1.bf16.msra.mxu0 %v297
        %318 = vmatprep.subr.bf16.mxu0 0
        %319 = vmatpush1.bf16.msra.mxu0 %v298
        %320 = vmatprep.subr.bf16.mxu0 0
        %321 = vmatpush1.bf16.msra.mxu0 %v299
        %322 = vmatprep.subr.bf16.mxu0 0
        %323 = vmatpush1.bf16.msra.mxu0 %v300
        %324 = vmatprep.subr.bf16.mxu0 0
        %325 = vmatpush1.bf16.msra.mxu0 %v301
        %326 = vmatprep.subr.bf16.mxu0 0
        %327 = vmatpush1.bf16.msra.mxu0 0
        %328 = vmatprep.subr.bf16.mxu0 0
        %329 = vmatpush1.bf16.msra.mxu0 0
        %330 = vmatprep.subr.bf16.mxu0 0
        %331 = vmatpush1.bf16.msra.mxu0 0
        %332 = vmatprep.subr.bf16.mxu0 0
        %333 = vmatpush1.bf16.msra.mxu0 0
        %334 = vmatprep.subr.bf16.mxu0 0
        %335 = vmatpush1.bf16.msra.mxu0 0
        %336 = vmatprep.subr.bf16.mxu0 0
        %337 = vmatpush1.bf16.msra.mxu0 0
        %338 = vmatprep.subr.bf16.mxu0 0
        %339 = vmatpush1.bf16.msra.mxu0 0
        %340 = vmatprep.subr.bf16.mxu0 0
        %341 = vmatpush1.bf16.msra.mxu0 0
        %342 = vmatprep.mubr.bf16.mxu0 0
        %343 = vmatmul.mubr.bf16.gmra.mrb[0].mxu0 %v254
        %v344 = vpop.f32.mrb[0].mxu0
        %v345 = vadd.f32 %v236, %v344
        %v346 = vpop.f32.mrb[0].mxu0
        %v347 = vpop.f32.mrb[0].mxu0
        %v348 = vadd.f32 %v236, %v347
        %v349 = vpop.f32.mrb[0].mxu0
        %350 = vmatprep.mubr.bf16.mxu0 0
        %351 = vmatmul.mubr.bf16.gmra.mrb[0].mxu0 %v255
        %v352 = vpop.f32.mrb[0].mxu0
        %v353 = vadd.f32 %v236, %v352
        %v354 = vpop.f32.mrb[0].mxu0
        %v355 = vpop.f32.mrb[0].mxu0
        %v356 = vadd.f32 %v236, %v355
        %v357 = vpop.f32.mrb[0].mxu0
        %358 = vmatprep.mubr.bf16.mxu0 0
        %359 = vmatmul.mubr.bf16.gmra.mrb[0].mxu0 %v256
        %v360 = vpop.f32.mrb[0].mxu0
        %v361 = vadd.f32 %v236, %v360
        %v362 = vpop.f32.mrb[0].mxu0
        %v363 = vpop.f32.mrb[0].mxu0
        %v364 = vadd.f32 %v236, %v363
        %v365 = vpop.f32.mrb[0].mxu0
        %366 = vmatprep.mubr.bf16.mxu0 0
        %367 = vmatmul.mubr.bf16.gmra.mrb[0].mxu0 %v257
        %v368 = vpop.f32.mrb[0].mxu0
        %v369 = vadd.f32 %v236, %v368
        %v370 = vpop.f32.mrb[0].mxu0
        %v371 = vpop.f32.mrb[0].mxu0
        %v372 = vadd.f32 %v236, %v371
        %v373 = vpop.f32.mrb[0].mxu0
        %374 = vdwg.mxu0
        %v375 = vmax.f32 %v345, 0.0
        %v376 = vmax.f32 %v348, 0.0
        %v377 = vmax.f32 %v353, 0.0
        %v378 = vmax.f32 %v356, 0.0
        %v379 = vmax.f32 %v361, 0.0
        %v380 = vmax.f32 %v364, 0.0
        %v381 = vmax.f32 %v369, 0.0
        %v382 = vmax.f32 %v372, 0.0
        %383 = vst [vmem:[%s203] sm:$0xff] %v375
        %384 = vst [vmem:[%s203 + $0x8] sm:$0xff] %v376
        %385 = vst [vmem:[%s203 + $0x10] sm:$0xff] %v377
        %386 = vst [vmem:[%s203 + $0x18] sm:$0xff] %v378
        %387 = vst [vmem:[%s203 + $0x20] sm:$0xff] %v379
        %388 = vst [vmem:[%s203 + $0x28] sm:$0xff] %v380
        %389 = vst [vmem:[%s203 + $0x30] sm:$0xff] %v381
        %390 = vst [vmem:[%s203 + $0x38] sm:$0xff] %v382
        %s391 = sand.u32 %s97, 1
        %s392 = scalar_lea.sflag [#allocation4], %s391
        %s393 = sand.u32 %s97, 1
        %s394 = smul.addr %s393, 64
        %s395 = scalar_lea.vmem [#allocation7], %s394
        // Predicated region
        $region41: #{tpu_custom_call.1} parent=31 // pred_check
          %p396 = pneg %p107
        $region42: #{tpu_custom_call.1} parent=31 // pred_check_branch
          %398 = sbr.rel (%p396) target = $region44
        $region43: #{tpu_custom_call.1} parent=31 // pred_region
          %s399 = smul.u32 8, %s21
          %s401 = ssub.s32 1024, 1024
          %402 = vsyncadd %s392, %s401
          %s403 = smul.addr %s399, 128
          %s404 = scalar_lea.hbm %s3, %s403
          %s405 = sshll.u32 %s395, 4
          %s406 = int_to_ptr.vmem [resolvable:$true] %s405
          %411 = dma.vmem_to_hbm [thread:$0]  %s406, 1024, %s404, %s392, 128, 128, 8
        $region44: #{tpu_custom_call.1} parent=31 // pred_fallthru
          _
      $region32: #{tpu_custom_call.1} parent=5 // pred_fallthru
        _
      %p412 = scmp.le.s32.totalorder 2, %s16
      // Predicated region
      $region45: #{tpu_custom_call.1} parent=5 // pred_check
        %p413 = pneg %p412
      $region46: #{tpu_custom_call.1} parent=5 // pred_check_branch
        %415 = sbr.rel (%p413) target = $region48
      $region47: #{tpu_custom_call.1} parent=5 // pred_region
        %s416 = ssub.s32 %s16, 2
        // Predicated region
        $region49: #{tpu_custom_call.1} parent=47 // pred_check
          %p417 = pneg %p113
        $region50: #{tpu_custom_call.1} parent=47 // pred_check_branch
          %419 = sbr.rel (%p417) target = $region52
        $region51: #{tpu_custom_call.1} parent=47 // pred_region
          %s420 = sand.u32 %s98, 1
          %s421 = scalar_lea.sflag [#allocation4], %s420
          %s422 = sand.u32 %s98, 1
          %s423 = smul.addr %s422, 64
          %s424 = scalar_lea.vmem [#allocation7], %s423
          %425 = dma.done %s421, 1024
        $region52: #{tpu_custom_call.1} parent=47 // pred_fallthru
          _
      $region48: #{tpu_custom_call.1} parent=5 // pred_fallthru
        _
    $region6: #{tpu_custom_call.1} parent=1 // loop_footer
      %s20 = sadd.s32 1, %s16
    $region7: #{tpu_custom_call.1} parent=1 // loop_footer_branch
      %15 = sbr.rel target = $region3
    $region8: #{tpu_custom_call.1} parent=1 // loop_exit
      _
    %426 = vsyncpa [#allocation3], 1
    %s427 = scalar_lea.sflag [#allocation3], 1
    %428 = vsyncpa %s427, 1
    %429 = vsyncpa [#allocation6], 1
    %430 = vsyncpa [#allocation4], 1
    %s431 = scalar_lea.sflag [#allocation4], 1
    %432 = vsyncpa %s431, 1

</llo_original>
